<compile_context>
chip_gen: v6e
topology: v6e:2x2x1
jax: 0.10.0
libtpu: 0.0.40
codegen_flags: <defaults>
</compile_context>

<pallas_src>
from typing import List, Mapping, Optional, Tuple

import numpy as np
import jax
import jax.numpy as jnp
from jax.experimental import pallas as pl
from jax.experimental.pallas import tpu as pltpu


_LANE = 128
_SUBLANE = 8
_FULL_UNROLL_K = 32        # fully unroll the in-block K loop up to this length
_FORI_UNROLL = 8           # unroll factor for the fori_loop K path

_SUPPORTED_DTYPES = (
    jnp.float32, jnp.bfloat16, jnp.float16,
    jnp.int32, jnp.uint32, jnp.int16, jnp.uint16, jnp.int8, jnp.uint8,
)


# --------------------------------------------------------------------------
# Hardware queries (best-effort; conservative defaults if they fail).
# --------------------------------------------------------------------------
def _tpu_vmem_capacity_bytes() -> int:
    try:
        info = pltpu.get_tpu_info()
        for name in ("vmem_capacity_bytes", "vmem_bytes", "vmem_size_bytes"):
            v = getattr(info, name, None)
            if isinstance(v, (int, np.integer)) and int(v) > 0:
                return int(v)
    except Exception:
        pass
    return 64 * 1024 * 1024          # conservative (v7x per-TC size)


def _vmem_budgets() -> Tuple[int, int, int]:
    """(input-block budget, total working-set budget, vmem_limit_bytes)."""
    cap = _tpu_vmem_capacity_bytes()
    if cap >= 96 * 1024 * 1024:      # v5e / v6e: 128 MiB VMEM per core
        return 12 * 1024 * 1024, 48 * 1024 * 1024, 96 * 1024 * 1024
    # v7x: 64 MiB per TensorCore -> smaller blocks, keep headroom.
    return 6 * 1024 * 1024, 24 * 1024 * 1024, 48 * 1024 * 1024


def _device_kind() -> str:
    try:
        return jax.devices()[0].device_kind.lower()
    except Exception:
        return ""


def _tensorcores_per_chip() -> int:
    kind = _device_kind()
    if any(t in kind for t in ("v7", "v4", "v5p")):
        return 2
    return 1


def _has_native_bf16_vpu() -> bool:
    kind = _device_kind()
    return any(t in kind for t in ("v6", "v7", "trillium"))


# --------------------------------------------------------------------------
# Kernel
# --------------------------------------------------------------------------
def _make_max_kernel(*, k: int, tile_k: int, num_k_steps: int,
                     compute_dtype, out_dtype):
    """Running max / first-occurrence argmax over the (major) K axis."""
    needs_k_mask = (num_k_steps * tile_k) != k
    full_unroll = tile_k <= _FULL_UNROLL_K
    if jnp.issubdtype(compute_dtype, jnp.floating):
        init_val = -np.inf
    else:
        init_val = int(jnp.iinfo(compute_dtype).min)

    def scan_block(x_ref, cur_val, cur_idx, k_base):
        # x_ref: (tile_pre, tile_k, tile_pb, 128); accumulators: (tile_pre, tile_pb, 128)
        def step(i, carry):
            cv, ci = carry
            xi = x_ref[:, i, :, :].astype(compute_dtype)   # major-dim slice
            g = k_base + i
            upd = xi > cv                 # strict '>' keeps the first occurrence
            if needs_k_mask:
                upd = jnp.logical_and(upd, g < k)   # boundary K block is padded
            cv = jnp.where(upd, xi, cv)
            ci = jnp.where(upd, g, ci)
            return cv, ci

        if full_unroll:
            carry = (cur_val, cur_idx)
            for i in range(tile_k):
                carry = step(i, carry)
            return carry
        return jax.lax.fori_loop(0, tile_k, step, (cur_val, cur_idx),
                                 unroll=_FORI_UNROLL)

    if num_k_steps == 1:
        # All of K in one block: no scratch, 2-D grid.
        def kernel(x_ref, val_ref, idx_ref):
            shape = val_ref.shape
            cur_val = jnp.full(shape, init_val, compute_dtype)
            cur_idx = jnp.zeros(shape, jnp.int32)
            cur_val, cur_idx = scan_block(x_ref, cur_val, cur_idx, 0)
            val_ref[...] = cur_val.astype(out_dtype)
            idx_ref[...] = cur_idx

        return kernel, False

    # K tiled onto an "arbitrary" grid axis: accumulate in VMEM scratch.
    def kernel(x_ref, val_ref, idx_ref, vacc_ref, iacc_ref):
        kid = pl.program_id(2)

        @pl.when(kid == 0)
        def _():
            vacc_ref[...] = jnp.full(vacc_ref.shape, init_val, compute_dtype)
            iacc_ref[...] = jnp.zeros(iacc_ref.shape, jnp.int32)

        cur_val, cur_idx = scan_block(x_ref, vacc_ref[...], iacc_ref[...],
                                      kid * tile_k)
        vacc_ref[...] = cur_val
        iacc_ref[...] = cur_idx

        @pl.when(kid == pl.num_programs(2) - 1)
        def _():
            val_ref[...] = cur_val.astype(out_dtype)
            idx_ref[...] = cur_idx

    return kernel, True


# --------------------------------------------------------------------------
# Tiling
# --------------------------------------------------------------------------
def _choose_tiles(pre, k, postb, itemsize, comp_itemsize,
                  block_budget, total_budget, cores):
    lane_bytes = _LANE * itemsize
    base_pb = min(postb, _SUBLANE)

    # K tile: whole K in one block if it fits with the minimal footprint,
    # otherwise split K onto a third ("arbitrary") grid axis.
    tile_k = min(k, max(1, block_budget // (base_pb * lane_bytes)))
    num_k = -(-k // tile_k)

    # Per-(pre-row, lane-block) VMEM cost: double-buffered input +
    # double-buffered outputs (values + int32 idx) + accumulator scratch
    # when K is split across grid steps.
    unit = (2 * tile_k * lane_bytes
            + 2 * (itemsize + 4) * _LANE
            + ((comp_itemsize + 4) * _LANE if num_k > 1 else 0))

    max_pb = max(1, min(total_budget // unit,
                        block_budget // (tile_k * lane_bytes)))
    if postb <= max_pb:
        tile_pb = postb                              # full extent allowed
    else:
        tile_pb = max(_SUBLANE, (max_pb // _SUBLANE) * _SUBLANE)

    per_pre = tile_pb * unit
    max_pre = max(1, min(total_budget // per_pre,
                         block_budget // (tile_k * tile_pb * lane_bytes)))
    tile_pre = min(pre, max_pre)

    # Guarantee >= 2 steps on a "parallel" axis when the chip has 2 TCs.
    if cores >= 2 and (-(-pre // tile_pre)) * (-(-postb // tile_pb)) == 1:
        if postb > _SUBLANE:
            tile_pb = max(_SUBLANE, ((postb + 15) // 16) * _SUBLANE)
        elif pre >= 2:
            tile_pre = -(-pre // 2)

    return tile_pre, tile_k, tile_pb, num_k


# --------------------------------------------------------------------------
# torch.Tensor.max(dim, keepdim) equivalent
# --------------------------------------------------------------------------
def pallas_max_with_indices(x: jax.Array, dim: int, keepdim: bool = False, *,
                            block_budget_bytes: Optional[int] = None,
                            total_budget_bytes: Optional[int] = None):
    """Returns (values, int32 indices), matching torch's max(dim, keepdim)."""
    # TODO(synk): torch returns int64 indices; we return int32 (JAX x64 off).
    # TODO(synk): NaN semantics differ from torch.max: strict '>' skips NaNs
    #             instead of propagating them with their index.
    ndim = x.ndim
    dim = dim % ndim
    k = int(x.shape[dim])
    pre = int(np.prod(x.shape[:dim], dtype=np.int64)) if dim > 0 else 1
    post = int(np.prod(x.shape[dim + 1:], dtype=np.int64)) if dim < ndim - 1 else 1

    result_shape = list(x.shape)
    if keepdim:
        result_shape[dim] = 1
    else:
        del result_shape[dim]
    result_shape = tuple(result_shape)

    def _xla_fallback():
        vals = jnp.max(x, axis=dim)
        idxs = jnp.argmax(x, axis=dim).astype(jnp.int32)
        if keepdim:
            vals = jnp.expand_dims(vals, dim)
            idxs = jnp.expand_dims(idxs, dim)
        return vals, idxs

    dtype_ok = any(x.dtype == np.dtype(d) for d in _SUPPORTED_DTYPES)
    # TODO(synk): post not a multiple of 128 currently routes to XLA; a
    #             full-extent lane-block variant could keep it in Pallas.
    if (not dtype_ok or k <= 1 or post < _LANE or post % _LANE != 0
            or pre * post < _SUBLANE * _LANE):
        return _xla_fallback()

    itemsize = int(np.dtype(x.dtype).itemsize)

    # Compute dtype: keep bf16 native on v6e/v7x; upcast on older chips.
    if jnp.issubdtype(x.dtype, jnp.floating):
        if itemsize >= 4 or (x.dtype == jnp.bfloat16 and _has_native_bf16_vpu()):
            compute_dtype = x.dtype
        else:
            compute_dtype = jnp.float32
    else:
        compute_dtype = x.dtype if itemsize >= 4 else jnp.int32
    comp_itemsize = int(np.dtype(compute_dtype).itemsize)

    block_budget, total_budget, vmem_limit = _vmem_budgets()
    if block_budget_bytes is not None:
        block_budget = int(block_budget_bytes)
    if total_budget_bytes is not None:
        total_budget = int(total_budget_bytes)

    postb = post // _LANE
    tile_pre, tile_k, tile_pb, num_k = _choose_tiles(
        pre, k, postb, itemsize, comp_itemsize,
        block_budget, total_budget, _tensorcores_per_chip())

    x4 = x.reshape(pre, k, postb, _LANE)

    kernel, has_scratch = _make_max_kernel(
        k=k, tile_k=tile_k, num_k_steps=num_k,
        compute_dtype=compute_dtype, out_dtype=x.dtype)

    out_shapes = (jax.ShapeDtypeStruct((pre, postb, _LANE), x.dtype),
                  jax.ShapeDtypeStruct((pre, postb, _LANE), jnp.int32))
    cost = pl.CostEstimate(
        flops=3 * pre * k * post, transcendentals=0,
        bytes_accessed=pre * k * post * itemsize + pre * post * (itemsize + 4))

    if not has_scratch:
        vals3, idxs3 = pl.pallas_call(
            kernel,
            out_shape=out_shapes,
            grid=(pl.cdiv(pre, tile_pre), pl.cdiv(postb, tile_pb)),
            in_specs=[pl.BlockSpec((tile_pre, tile_k, tile_pb, _LANE),
                                   lambda i, j: (i, 0, j, 0))],
            out_specs=(pl.BlockSpec((tile_pre, tile_pb, _LANE),
                                    lambda i, j: (i, j, 0)),
                       pl.BlockSpec((tile_pre, tile_pb, _LANE),
                                    lambda i, j: (i, j, 0))),
            compiler_params=pltpu.CompilerParams(
                dimension_semantics=("parallel", "parallel"),
                vmem_limit_bytes=vmem_limit),
            cost_estimate=cost,
        )(x4)
    else:
        vals3, idxs3 = pl.pallas_call(
            kernel,
            out_shape=out_shapes,
            grid=(pl.cdiv(pre, tile_pre), pl.cdiv(postb, tile_pb), num_k),
            in_specs=[pl.BlockSpec((tile_pre, tile_k, tile_pb, _LANE),
                                   lambda i, j, kk: (i, kk, j, 0))],
            out_specs=(pl.BlockSpec((tile_pre, tile_pb, _LANE),
                                    lambda i, j, kk: (i, j, 0)),
                       pl.BlockSpec((tile_pre, tile_pb, _LANE),
                                    lambda i, j, kk: (i, j, 0))),
            scratch_shapes=[
                pltpu.VMEM((tile_pre, tile_pb, _LANE), compute_dtype),
                pltpu.VMEM((tile_pre, tile_pb, _LANE), jnp.int32)],
            compiler_params=pltpu.CompilerParams(
                dimension_semantics=("parallel", "parallel", "arbitrary"),
                vmem_limit_bytes=vmem_limit),
            cost_estimate=cost,
        )(x4)

    return vals3.reshape(result_shape), idxs3.reshape(result_shape)


# --------------------------------------------------------------------------
# Module port
# --------------------------------------------------------------------------
class MaxPostProcess:
    """JAX/Pallas port of hat MaxPostProcess."""

    def __init__(self, data_names: list, out_names: List[List[str]], dim: int,
                 keepdim: bool = False, return_indices: bool = True):
        self.data_names = data_names
        self.out_names = out_names
        self.dim = dim
        self.keepdim = keepdim
        self.return_indices = return_indices

    def _max_list(self, values):
        # Batch same-shaped list entries into one call (one launch / pipeline).
        if (len(values) > 1 and
                len({(tuple(v.shape), str(v.dtype)) for v in values}) == 1):
            stacked = jnp.stack(values, axis=0)
            d = self.dim if self.dim < 0 else self.dim + 1
            s_vals, s_idx = pallas_max_with_indices(stacked, d, self.keepdim)
            n = len(values)
            return [s_vals[i] for i in range(n)], [s_idx[i] for i in range(n)]
        scores, classes = [], []
        for v in values:
            s, c = pallas_max_with_indices(v, self.dim, self.keepdim)
            scores.append(s)
            classes.append(c)
        return scores, classes

    def __call__(self, pred_dict: Mapping, *args):
        pred_dict = dict(pred_dict)
        for idx, data_name in enumerate(self.data_names):
            assert data_name in pred_dict
            values = pred_dict[data_name]
            if isinstance(values, list):
                score_datas, classes_datas = self._max_list(values)
                pred_dict[self.out_names[idx][0]] = score_datas
                if self.return_indices:
                    pred_dict[self.out_names[idx][1]] = classes_datas
            elif isinstance(values, jax.Array):
                scores, classes = pallas_max_with_indices(
                    values, self.dim, self.keepdim)
                pred_dict[self.out_names[idx][0]] = scores
                if self.return_indices:
                    pred_dict[self.out_names[idx][1]] = classes
            else:
                raise TypeError("only support jax.Array or list[jax.Array]")
        return pred_dict


# --------------------------------------------------------------------------
# Self-test
# --------------------------------------------------------------------------
if __name__ == "__main__":
    key = jax.random.PRNGKey(0)
    k1, k2, k3, k4, k5 = jax.random.split(key, 5)

    # Segmentation-style logits: pre=2, K=19, post=4096 -> Pallas path.
    x = jax.random.normal(k1, (2, 19, 64, 64), dtype=jnp.float32)
    # Tiny aux list (post = 64, not a multiple of 128): XLA fallback.
    y0 = jax.random.normal(k2, (2, 4, 8, 8), dtype=jnp.float32)
    y1 = jax.random.normal(k3, (2, 4, 8, 8), dtype=jnp.float32)

    pred_dict = {"seg_logits": x, "aux_logits": [y0, y1]}
    postproc = MaxPostProcess(
        data_names=["seg_logits", "aux_logits"],
        out_names=[["seg_scores", "seg_classes"],
                   ["aux_scores", "aux_classes"]],
        dim=1, keepdim=False, return_indices=True)
    out = postproc(pred_dict)

    jax.block_until_ready(out["seg_scores"])
    jax.block_until_ready(out["seg_classes"])
    for t in out["aux_scores"] + out["aux_classes"]:
        jax.block_until_ready(t)

    assert out["seg_scores"].shape == (2, 64, 64)
    assert out["seg_classes"].shape == (2, 64, 64)
    np.testing.assert_array_equal(np.asarray(out["seg_scores"]),
                                  np.asarray(jnp.max(x, axis=1)))
    np.testing.assert_array_equal(
        np.asarray(out["seg_classes"]),
        np.asarray(jnp.argmax(x, axis=1).astype(jnp.int32)))
    for yt, s, c in zip([y0, y1], out["aux_scores"], out["aux_classes"]):
        np.testing.assert_array_equal(np.asarray(s),
                                      np.asarray(jnp.max(yt, axis=1)))
        np.testing.assert_array_equal(
            np.asarray(c),
            np.asarray(jnp.argmax(yt, axis=1).astype(jnp.int32)))

    # keepdim path.
    vkd, ikd = pallas_max_with_indices(x, 1, keepdim=True)
    jax.block_until_ready(vkd)
    assert vkd.shape == (2, 1, 64, 64) and ikd.shape == (2, 1, 64, 64)
    np.testing.assert_array_equal(np.asarray(vkd),
                                  np.asarray(jnp.max(x, axis=1, keepdims=True)))

    # bf16 path (native compute on v6e/v7x, f32 compute elsewhere).
    xb = jax.random.normal(k4, (2, 37, 16, 128), dtype=jnp.bfloat16)
    vb, ib = pallas_max_with_indices(xb, 1, keepdim=False)
    jax.block_until_ready(vb)
    np.testing.assert_array_equal(np.asarray(vb, dtype=np.float32),
                                  np.asarray(jnp.max(xb, axis=1), dtype=np.float32))
    gathered = jnp.take_along_axis(xb, ib[:, None, :, :], axis=1)[:, 0]
    np.testing.assert_array_equal(np.asarray(gathered, dtype=np.float32),
                                  np.asarray(vb, dtype=np.float32))

    # Force the K-tiled (grid-axis + scratch accumulator + boundary mask) path.
    xk = jax.random.normal(k5, (2, 100, 4, 128), dtype=jnp.float32)
    vk, ik = pallas_max_with_indices(xk, 1, block_budget_bytes=32 * 1024)
    jax.block_until_ready(vk)
    np.testing.assert_array_equal(np.asarray(vk), np.asarray(jnp.max(xk, axis=1)))
    np.testing.assert_array_equal(
        np.asarray(ik), np.asarray(jnp.argmax(xk, axis=1).astype(jnp.int32)))

    # Force the fori_loop (long in-block K) path, single K step.
    vf, if_ = pallas_max_with_indices(xk, 1, block_budget_bytes=256 * 1024)
    jax.block_until_ready(vf)
    np.testing.assert_array_equal(np.asarray(vf), np.asarray(jnp.max(xk, axis=1)))
    np.testing.assert_array_equal(
        np.asarray(if_), np.asarray(jnp.argmax(xk, axis=1).astype(jnp.int32)))

    print("KERNEL_OK")
</pallas_src>

<mosaic_0001>
module attributes {stable_mosaic.version = 11 : i64} {
  func.func @kernel(%arg0: i32, %arg1: i32, %arg2: memref<2x19x32x128xf32, #tpu.memory_space<vmem>>, %arg3: memref<2x32x128xf32, #tpu.memory_space<vmem>>, %arg4: memref<2x32x128xi32, #tpu.memory_space<vmem>>) attributes {dimension_semantics = [#tpu.dimension_semantics<parallel>, #tpu.dimension_semantics<parallel>], iteration_bounds = array<i64: 1, 1>, scalar_prefetch = 0 : i64, scratch_operands = 0 : i64, tpu.core_type = #tpu.core_type<tc>, window_params = [{transform_indices = @transform_0, window_bounds = array<i64: 2, 19, 32, 128>}, {transform_indices = @transform_1, window_bounds = array<i64: 2, 32, 128>}, {transform_indices = @transform_2, window_bounds = array<i64: 2, 32, 128>}]} {
    %cst = arith.constant 0xFF800000 : f32
    %0 = vector.broadcast %cst : f32 to vector<2x32x128xf32>
    %c0_i32 = arith.constant 0 : i32
    %1 = vector.broadcast %c0_i32 : i32 to vector<2x32x128xi32>
    %c0 = arith.constant 0 : index
    %c0_0 = arith.constant 0 : index
    %c0_1 = arith.constant 0 : index
    %c0_2 = arith.constant 0 : index
    %2 = vector.load %arg2[%c0, %c0_0, %c0_1, %c0_2] : memref<2x19x32x128xf32, #tpu.memory_space<vmem>>, vector<2x1x32x128xf32>
    %3 = vector.shape_cast %2 : vector<2x1x32x128xf32> to vector<2x32x128xf32>
    %4 = arith.cmpf ogt, %3, %0 : vector<2x32x128xf32>
    %5 = arith.select %4, %3, %0 : vector<2x32x128xi1>, vector<2x32x128xf32>
    %c0_i32_3 = arith.constant 0 : i32
    %6 = vector.broadcast %c0_i32_3 : i32 to vector<2x32x128xi32>
    %7 = arith.select %4, %6, %1 : vector<2x32x128xi1>, vector<2x32x128xi32>
    %c0_4 = arith.constant 0 : index
    %c1 = arith.constant 1 : index
    %c0_5 = arith.constant 0 : index
    %c0_6 = arith.constant 0 : index
    %8 = vector.load %arg2[%c0_4, %c1, %c0_5, %c0_6] : memref<2x19x32x128xf32, #tpu.memory_space<vmem>>, vector<2x1x32x128xf32>
    %9 = vector.shape_cast %8 : vector<2x1x32x128xf32> to vector<2x32x128xf32>
    %10 = arith.cmpf ogt, %9, %5 : vector<2x32x128xf32>
    %11 = arith.select %10, %9, %5 : vector<2x32x128xi1>, vector<2x32x128xf32>
    %c1_i32 = arith.constant 1 : i32
    %12 = vector.broadcast %c1_i32 : i32 to vector<2x32x128xi32>
    %13 = arith.select %10, %12, %7 : vector<2x32x128xi1>, vector<2x32x128xi32>
    %c0_7 = arith.constant 0 : index
    %c2 = arith.constant 2 : index
    %c0_8 = arith.constant 0 : index
    %c0_9 = arith.constant 0 : index
    %14 = vector.load %arg2[%c0_7, %c2, %c0_8, %c0_9] : memref<2x19x32x128xf32, #tpu.memory_space<vmem>>, vector<2x1x32x128xf32>
    %15 = vector.shape_cast %14 : vector<2x1x32x128xf32> to vector<2x32x128xf32>
    %16 = arith.cmpf ogt, %15, %11 : vector<2x32x128xf32>
    %17 = arith.select %16, %15, %11 : vector<2x32x128xi1>, vector<2x32x128xf32>
    %c2_i32 = arith.constant 2 : i32
    %18 = vector.broadcast %c2_i32 : i32 to vector<2x32x128xi32>
    %19 = arith.select %16, %18, %13 : vector<2x32x128xi1>, vector<2x32x128xi32>
    %c0_10 = arith.constant 0 : index
    %c3 = arith.constant 3 : index
    %c0_11 = arith.constant 0 : index
    %c0_12 = arith.constant 0 : index
    %20 = vector.load %arg2[%c0_10, %c3, %c0_11, %c0_12] : memref<2x19x32x128xf32, #tpu.memory_space<vmem>>, vector<2x1x32x128xf32>
    %21 = vector.shape_cast %20 : vector<2x1x32x128xf32> to vector<2x32x128xf32>
    %22 = arith.cmpf ogt, %21, %17 : vector<2x32x128xf32>
    %23 = arith.select %22, %21, %17 : vector<2x32x128xi1>, vector<2x32x128xf32>
    %c3_i32 = arith.constant 3 : i32
    %24 = vector.broadcast %c3_i32 : i32 to vector<2x32x128xi32>
    %25 = arith.select %22, %24, %19 : vector<2x32x128xi1>, vector<2x32x128xi32>
    %c0_13 = arith.constant 0 : index
    %c4 = arith.constant 4 : index
    %c0_14 = arith.constant 0 : index
    %c0_15 = arith.constant 0 : index
    %26 = vector.load %arg2[%c0_13, %c4, %c0_14, %c0_15] : memref<2x19x32x128xf32, #tpu.memory_space<vmem>>, vector<2x1x32x128xf32>
    %27 = vector.shape_cast %26 : vector<2x1x32x128xf32> to vector<2x32x128xf32>
    %28 = arith.cmpf ogt, %27, %23 : vector<2x32x128xf32>
    %29 = arith.select %28, %27, %23 : vector<2x32x128xi1>, vector<2x32x128xf32>
    %c4_i32 = arith.constant 4 : i32
    %30 = vector.broadcast %c4_i32 : i32 to vector<2x32x128xi32>
    %31 = arith.select %28, %30, %25 : vector<2x32x128xi1>, vector<2x32x128xi32>
    %c0_16 = arith.constant 0 : index
    %c5 = arith.constant 5 : index
    %c0_17 = arith.constant 0 : index
    %c0_18 = arith.constant 0 : index
    %32 = vector.load %arg2[%c0_16, %c5, %c0_17, %c0_18] : memref<2x19x32x128xf32, #tpu.memory_space<vmem>>, vector<2x1x32x128xf32>
    %33 = vector.shape_cast %32 : vector<2x1x32x128xf32> to vector<2x32x128xf32>
    %34 = arith.cmpf ogt, %33, %29 : vector<2x32x128xf32>
    %35 = arith.select %34, %33, %29 : vector<2x32x128xi1>, vector<2x32x128xf32>
    %c5_i32 = arith.constant 5 : i32
    %36 = vector.broadcast %c5_i32 : i32 to vector<2x32x128xi32>
    %37 = arith.select %34, %36, %31 : vector<2x32x128xi1>, vector<2x32x128xi32>
    %c0_19 = arith.constant 0 : index
    %c6 = arith.constant 6 : index
    %c0_20 = arith.constant 0 : index
    %c0_21 = arith.constant 0 : index
    %38 = vector.load %arg2[%c0_19, %c6, %c0_20, %c0_21] : memref<2x19x32x128xf32, #tpu.memory_space<vmem>>, vector<2x1x32x128xf32>
    %39 = vector.shape_cast %38 : vector<2x1x32x128xf32> to vector<2x32x128xf32>
    %40 = arith.cmpf ogt, %39, %35 : vector<2x32x128xf32>
    %41 = arith.select %40, %39, %35 : vector<2x32x128xi1>, vector<2x32x128xf32>
    %c6_i32 = arith.constant 6 : i32
    %42 = vector.broadcast %c6_i32 : i32 to vector<2x32x128xi32>
    %43 = arith.select %40, %42, %37 : vector<2x32x128xi1>, vector<2x32x128xi32>
    %c0_22 = arith.constant 0 : index
    %c7 = arith.constant 7 : index
    %c0_23 = arith.constant 0 : index
    %c0_24 = arith.constant 0 : index
    %44 = vector.load %arg2[%c0_22, %c7, %c0_23, %c0_24] : memref<2x19x32x128xf32, #tpu.memory_space<vmem>>, vector<2x1x32x128xf32>
    %45 = vector.shape_cast %44 : vector<2x1x32x128xf32> to vector<2x32x128xf32>
    %46 = arith.cmpf ogt, %45, %41 : vector<2x32x128xf32>
    %47 = arith.select %46, %45, %41 : vector<2x32x128xi1>, vector<2x32x128xf32>
    %c7_i32 = arith.constant 7 : i32
    %48 = vector.broadcast %c7_i32 : i32 to vector<2x32x128xi32>
    %49 = arith.select %46, %48, %43 : vector<2x32x128xi1>, vector<2x32x128xi32>
    %c0_25 = arith.constant 0 : index
    %c8 = arith.constant 8 : index
    %c0_26 = arith.constant 0 : index
    %c0_27 = arith.constant 0 : index
    %50 = vector.load %arg2[%c0_25, %c8, %c0_26, %c0_27] : memref<2x19x32x128xf32, #tpu.memory_space<vmem>>, vector<2x1x32x128xf32>
    %51 = vector.shape_cast %50 : vector<2x1x32x128xf32> to vector<2x32x128xf32>
    %52 = arith.cmpf ogt, %51, %47 : vector<2x32x128xf32>
    %53 = arith.select %52, %51, %47 : vector<2x32x128xi1>, vector<2x32x128xf32>
    %c8_i32 = arith.constant 8 : i32
    %54 = vector.broadcast %c8_i32 : i32 to vector<2x32x128xi32>
    %55 = arith.select %52, %54, %49 : vector<2x32x128xi1>, vector<2x32x128xi32>
    %c0_28 = arith.constant 0 : index
    %c9 = arith.constant 9 : index
    %c0_29 = arith.constant 0 : index
    %c0_30 = arith.constant 0 : index
    %56 = vector.load %arg2[%c0_28, %c9, %c0_29, %c0_30] : memref<2x19x32x128xf32, #tpu.memory_space<vmem>>, vector<2x1x32x128xf32>
    %57 = vector.shape_cast %56 : vector<2x1x32x128xf32> to vector<2x32x128xf32>
    %58 = arith.cmpf ogt, %57, %53 : vector<2x32x128xf32>
    %59 = arith.select %58, %57, %53 : vector<2x32x128xi1>, vector<2x32x128xf32>
    %c9_i32 = arith.constant 9 : i32
    %60 = vector.broadcast %c9_i32 : i32 to vector<2x32x128xi32>
    %61 = arith.select %58, %60, %55 : vector<2x32x128xi1>, vector<2x32x128xi32>
    %c0_31 = arith.constant 0 : index
    %c10 = arith.constant 10 : index
    %c0_32 = arith.constant 0 : index
    %c0_33 = arith.constant 0 : index
    %62 = vector.load %arg2[%c0_31, %c10, %c0_32, %c0_33] : memref<2x19x32x128xf32, #tpu.memory_space<vmem>>, vector<2x1x32x128xf32>
    %63 = vector.shape_cast %62 : vector<2x1x32x128xf32> to vector<2x32x128xf32>
    %64 = arith.cmpf ogt, %63, %59 : vector<2x32x128xf32>
    %65 = arith.select %64, %63, %59 : vector<2x32x128xi1>, vector<2x32x128xf32>
    %c10_i32 = arith.constant 10 : i32
    %66 = vector.broadcast %c10_i32 : i32 to vector<2x32x128xi32>
    %67 = arith.select %64, %66, %61 : vector<2x32x128xi1>, vector<2x32x128xi32>
    %c0_34 = arith.constant 0 : index
    %c11 = arith.constant 11 : index
    %c0_35 = arith.constant 0 : index
    %c0_36 = arith.constant 0 : index
    %68 = vector.load %arg2[%c0_34, %c11, %c0_35, %c0_36] : memref<2x19x32x128xf32, #tpu.memory_space<vmem>>, vector<2x1x32x128xf32>
    %69 = vector.shape_cast %68 : vector<2x1x32x128xf32> to vector<2x32x128xf32>
    %70 = arith.cmpf ogt, %69, %65 : vector<2x32x128xf32>
    %71 = arith.select %70, %69, %65 : vector<2x32x128xi1>, vector<2x32x128xf32>
    %c11_i32 = arith.constant 11 : i32
    %72 = vector.broadcast %c11_i32 : i32 to vector<2x32x128xi32>
    %73 = arith.select %70, %72, %67 : vector<2x32x128xi1>, vector<2x32x128xi32>
    %c0_37 = arith.constant 0 : index
    %c12 = arith.constant 12 : index
    %c0_38 = arith.constant 0 : index
    %c0_39 = arith.constant 0 : index
    %74 = vector.load %arg2[%c0_37, %c12, %c0_38, %c0_39] : memref<2x19x32x128xf32, #tpu.memory_space<vmem>>, vector<2x1x32x128xf32>
    %75 = vector.shape_cast %74 : vector<2x1x32x128xf32> to vector<2x32x128xf32>
    %76 = arith.cmpf ogt, %75, %71 : vector<2x32x128xf32>
    %77 = arith.select %76, %75, %71 : vector<2x32x128xi1>, vector<2x32x128xf32>
    %c12_i32 = arith.constant 12 : i32
    %78 = vector.broadcast %c12_i32 : i32 to vector<2x32x128xi32>
    %79 = arith.select %76, %78, %73 : vector<2x32x128xi1>, vector<2x32x128xi32>
    %c0_40 = arith.constant 0 : index
    %c13 = arith.constant 13 : index
    %c0_41 = arith.constant 0 : index
    %c0_42 = arith.constant 0 : index
    %80 = vector.load %arg2[%c0_40, %c13, %c0_41, %c0_42] : memref<2x19x32x128xf32, #tpu.memory_space<vmem>>, vector<2x1x32x128xf32>
    %81 = vector.shape_cast %80 : vector<2x1x32x128xf32> to vector<2x32x128xf32>
    %82 = arith.cmpf ogt, %81, %77 : vector<2x32x128xf32>
    %83 = arith.select %82, %81, %77 : vector<2x32x128xi1>, vector<2x32x128xf32>
    %c13_i32 = arith.constant 13 : i32
    %84 = vector.broadcast %c13_i32 : i32 to vector<2x32x128xi32>
    %85 = arith.select %82, %84, %79 : vector<2x32x128xi1>, vector<2x32x128xi32>
    %c0_43 = arith.constant 0 : index
    %c14 = arith.constant 14 : index
    %c0_44 = arith.constant 0 : index
    %c0_45 = arith.constant 0 : index
    %86 = vector.load %arg2[%c0_43, %c14, %c0_44, %c0_45] : memref<2x19x32x128xf32, #tpu.memory_space<vmem>>, vector<2x1x32x128xf32>
    %87 = vector.shape_cast %86 : vector<2x1x32x128xf32> to vector<2x32x128xf32>
    %88 = arith.cmpf ogt, %87, %83 : vector<2x32x128xf32>
    %89 = arith.select %88, %87, %83 : vector<2x32x128xi1>, vector<2x32x128xf32>
    %c14_i32 = arith.constant 14 : i32
    %90 = vector.broadcast %c14_i32 : i32 to vector<2x32x128xi32>
    %91 = arith.select %88, %90, %85 : vector<2x32x128xi1>, vector<2x32x128xi32>
    %c0_46 = arith.constant 0 : index
    %c15 = arith.constant 15 : index
    %c0_47 = arith.constant 0 : index
    %c0_48 = arith.constant 0 : index
    %92 = vector.load %arg2[%c0_46, %c15, %c0_47, %c0_48] : memref<2x19x32x128xf32, #tpu.memory_space<vmem>>, vector<2x1x32x128xf32>
    %93 = vector.shape_cast %92 : vector<2x1x32x128xf32> to vector<2x32x128xf32>
    %94 = arith.cmpf ogt, %93, %89 : vector<2x32x128xf32>
    %95 = arith.select %94, %93, %89 : vector<2x32x128xi1>, vector<2x32x128xf32>
    %c15_i32 = arith.constant 15 : i32
    %96 = vector.broadcast %c15_i32 : i32 to vector<2x32x128xi32>
    %97 = arith.select %94, %96, %91 : vector<2x32x128xi1>, vector<2x32x128xi32>
    %c0_49 = arith.constant 0 : index
    %c16 = arith.constant 16 : index
    %c0_50 = arith.constant 0 : index
    %c0_51 = arith.constant 0 : index
    %98 = vector.load %arg2[%c0_49, %c16, %c0_50, %c0_51] : memref<2x19x32x128xf32, #tpu.memory_space<vmem>>, vector<2x1x32x128xf32>
    %99 = vector.shape_cast %98 : vector<2x1x32x128xf32> to vector<2x32x128xf32>
    %100 = arith.cmpf ogt, %99, %95 : vector<2x32x128xf32>
    %101 = arith.select %100, %99, %95 : vector<2x32x128xi1>, vector<2x32x128xf32>
    %c16_i32 = arith.constant 16 : i32
    %102 = vector.broadcast %c16_i32 : i32 to vector<2x32x128xi32>
    %103 = arith.select %100, %102, %97 : vector<2x32x128xi1>, vector<2x32x128xi32>
    %c0_52 = arith.constant 0 : index
    %c17 = arith.constant 17 : index
    %c0_53 = arith.constant 0 : index
    %c0_54 = arith.constant 0 : index
    %104 = vector.load %arg2[%c0_52, %c17, %c0_53, %c0_54] : memref<2x19x32x128xf32, #tpu.memory_space<vmem>>, vector<2x1x32x128xf32>
    %105 = vector.shape_cast %104 : vector<2x1x32x128xf32> to vector<2x32x128xf32>
    %106 = arith.cmpf ogt, %105, %101 : vector<2x32x128xf32>
    %107 = arith.select %106, %105, %101 : vector<2x32x128xi1>, vector<2x32x128xf32>
    %c17_i32 = arith.constant 17 : i32
    %108 = vector.broadcast %c17_i32 : i32 to vector<2x32x128xi32>
    %109 = arith.select %106, %108, %103 : vector<2x32x128xi1>, vector<2x32x128xi32>
    %c0_55 = arith.constant 0 : index
    %c18 = arith.constant 18 : index
    %c0_56 = arith.constant 0 : index
    %c0_57 = arith.constant 0 : index
    %110 = vector.load %arg2[%c0_55, %c18, %c0_56, %c0_57] : memref<2x19x32x128xf32, #tpu.memory_space<vmem>>, vector<2x1x32x128xf32>
    %111 = vector.shape_cast %110 : vector<2x1x32x128xf32> to vector<2x32x128xf32>
    %112 = arith.cmpf ogt, %111, %107 : vector<2x32x128xf32>
    %113 = arith.select %112, %111, %107 : vector<2x32x128xi1>, vector<2x32x128xf32>
    %c18_i32 = arith.constant 18 : i32
    %114 = vector.broadcast %c18_i32 : i32 to vector<2x32x128xi32>
    %115 = arith.select %112, %114, %109 : vector<2x32x128xi1>, vector<2x32x128xi32>
    %c0_58 = arith.constant 0 : index
    %c0_59 = arith.constant 0 : index
    %c0_60 = arith.constant 0 : index
    %116 = vector.load %arg3[%c0_58, %c0_59, %c0_60] : memref<2x32x128xf32, #tpu.memory_space<vmem>>, vector<2x32x128xf32>
    tpu.vector_store %arg3[%c0_58, %c0_59, %c0_60], %113 {strides = array<i32>} : memref<2x32x128xf32, #tpu.memory_space<vmem>>, vector<2x32x128xf32>,
    %c0_61 = arith.constant 0 : index
    %c0_62 = arith.constant 0 : index
    %c0_63 = arith.constant 0 : index
    %117 = vector.load %arg4[%c0_61, %c0_62, %c0_63] : memref<2x32x128xi32, #tpu.memory_space<vmem>>, vector<2x32x128xi32>
    tpu.vector_store %arg4[%c0_61, %c0_62, %c0_63], %115 {strides = array<i32>} : memref<2x32x128xi32, #tpu.memory_space<vmem>>, vector<2x32x128xi32>,
    return
  }
  func.func @transform_0(%arg0: i32, %arg1: i32) -> (i32, i32, i32, i32) {
    %c0_i32 = arith.constant 0 : i32
    %c0_i32_0 = arith.constant 0 : i32
    %c0_i32_1 = arith.constant 0 : i32
    return %arg0, %c0_i32, %arg1, %c0_i32_0 : i32, i32, i32, i32
  }
  func.func @transform_1(%arg0: i32, %arg1: i32) -> (i32, i32, i32) {
    %c0_i32 = arith.constant 0 : i32
    %c0_i32_0 = arith.constant 0 : i32
    return %arg0, %arg1, %c0_i32 : i32, i32, i32
  }
  func.func @transform_2(%arg0: i32, %arg1: i32) -> (i32, i32, i32) {
    %c0_i32 = arith.constant 0 : i32
    %c0_i32_0 = arith.constant 0 : i32
    return %arg0, %arg1, %c0_i32 : i32, i32, i32
  }
}

</mosaic_0001>

<llo_original>
// kernel: tpu_custom_call.1
$region0: #{tpu_custom_call.1}
  #allocation0 [shape = 'u32[]', space=smem, size = 0x4, offset = 0x4, fixed_abs, tag = 'smem constant byte address 0x4 - core index']
  #allocation1 [shape = 'u32[144,128]{1,0:T(1,128)}', space=vmem, size = 0x12000, scoped, tag = 'internal scratch']
  %s0 = inlined_call_operand.hbm [shape: f32[2,19,32,128], index: 0, kind: input, shape index: {}]
  %s1 = inlined_call_operand.hbm [shape: f32[2,32,128], index: 1, kind: output, shape index: {0}]
  %s2 = inlined_call_operand.hbm [shape: s32[2,32,128], index: 2, kind: output, shape index: {1}]
  %3 = xla_tuple %s1, %s2
  %s4 = sld [smem:[#allocation0]]
  $region26: #{tpu_custom_call.1} parent=0
    _
  %s6 = ssub.s32 1, %s4
  %s7 = scalar_select 0, %s6, %s4
  $region1: #{tpu_custom_call.1} parent=0
    #allocation2 [shape = 'u8[622592]{0}', space=vmem, size = 0x98000, scoped, tag = 'input window, operand 0, single buffered']
    #allocation3 [shape = 's32[1]{0}', space=sflag, size = 0x4, scoped, tag = 'scoped memory for tpu_custom_call.1']
    #allocation4 [shape = 's32[1]{0}', space=sflag, size = 0x4, scoped, tag = 'scoped memory for tpu_custom_call.1']
    #allocation5 [shape = 'u8[32768]{0}', space=vmem, size = 0x8000, scoped, tag = 'output window, operand 0, single buffered']
    #allocation6 [shape = 'u8[32768]{0}', space=vmem, size = 0x8000, scoped, tag = 'output window, operand 1, single buffered']
    #allocation7 [shape = 's32[1]{0}', space=sflag, size = 0x4, scoped, tag = 'scoped memory for tpu_custom_call.1']
    %8 = vsyncpa [#allocation3], 0
    %9 = vsyncpa [#allocation4], 0
    %10 = vsyncpa [#allocation7], 0
    // Predicated region
    $region2: #{tpu_custom_call.1} parent=1 // pred_check
      _
    $region3: #{tpu_custom_call.1} parent=1 // pred_check_branch
      %12 = sbr.rel (0) target = $region5
    $region4: #{tpu_custom_call.1} parent=1 // pred_region
      %s14 = ssub.s32 19456, 19456
      %15 = vsyncadd [#allocation3], %s14
      %s16 = sshll.u32 [#allocation2], 4
      %s17 = int_to_ptr.vmem [resolvable:$true] %s16
      %22 = dma.hbm_to_vmem [thread:$0]  %s0, 19456, %s17, [#allocation3], 128, 128, 8
    $region5: #{tpu_custom_call.1} parent=1 // pred_fallthru
      _
    // Predicated region
    $region6: #{tpu_custom_call.1} parent=1 // pred_check
      _
    $region7: #{tpu_custom_call.1} parent=1 // pred_check_branch
      %24 = sbr.rel (0) target = $region9
    $region8: #{tpu_custom_call.1} parent=1 // pred_region
      %25 = dma.done [#allocation3], 19456
    $region9: #{tpu_custom_call.1} parent=1 // pred_fallthru
      _
    %v26 = vld [vmem:[#allocation2] sm:$0xff]
    %v27 = vld [vmem:[#allocation2 + $0x8] sm:$0xff]
    %v28 = vld [vmem:[#allocation2 + $0x10] sm:$0xff]
    %v29 = vld [vmem:[#allocation2 + $0x18] sm:$0xff]
    %v30 = vld [vmem:[#allocation2 + $0x260] sm:$0xff]
    %v31 = vld [vmem:[#allocation2 + $0x268] sm:$0xff]
    %v32 = vld [vmem:[#allocation2 + $0x270] sm:$0xff]
    %v33 = vld [vmem:[#allocation2 + $0x278] sm:$0xff]
    %vm34 = vcmp.gt.f32.partialorder %v26, -inf
    %vm35 = vcmp.gt.f32.partialorder %v27, -inf
    %vm36 = vcmp.gt.f32.partialorder %v28, -inf
    %vm37 = vcmp.gt.f32.partialorder %v29, -inf
    %vm38 = vcmp.gt.f32.partialorder %v30, -inf
    %vm39 = vcmp.gt.f32.partialorder %v31, -inf
    %vm40 = vcmp.gt.f32.partialorder %v32, -inf
    %vm41 = vcmp.gt.f32.partialorder %v33, -inf
    %v42 = vsel %vm34, %v26, -inf
    %v43 = vsel %vm35, %v27, -inf
    %v44 = vsel %vm36, %v28, -inf
    %v45 = vsel %vm37, %v29, -inf
    %v46 = vsel %vm38, %v30, -inf
    %v47 = vsel %vm39, %v31, -inf
    %v48 = vsel %vm40, %v32, -inf
    %v49 = vsel %vm41, %v33, -inf
    %s50 = scalar_lea.vmem [#allocation2], 32
    %v51 = vld [vmem:[%s50] sm:$0xff]
    %v52 = vld [vmem:[%s50 + $0x8] sm:$0xff]
    %v53 = vld [vmem:[%s50 + $0x10] sm:$0xff]
    %v54 = vld [vmem:[%s50 + $0x18] sm:$0xff]
    %v55 = vld [vmem:[%s50 + $0x260] sm:$0xff]
    %v56 = vld [vmem:[%s50 + $0x268] sm:$0xff]
    %v57 = vld [vmem:[%s50 + $0x270] sm:$0xff]
    %v58 = vld [vmem:[%s50 + $0x278] sm:$0xff]
    %vm59 = vcmp.gt.f32.partialorder %v51, %v42
    %vm60 = vcmp.gt.f32.partialorder %v52, %v43
    %vm61 = vcmp.gt.f32.partialorder %v53, %v44
    %vm62 = vcmp.gt.f32.partialorder %v54, %v45
    %vm63 = vcmp.gt.f32.partialorder %v55, %v46
    %vm64 = vcmp.gt.f32.partialorder %v56, %v47
    %vm65 = vcmp.gt.f32.partialorder %v57, %v48
    %vm66 = vcmp.gt.f32.partialorder %v58, %v49
    %v67 = vsel %vm59, %v51, %v42
    %v68 = vsel %vm60, %v52, %v43
    %v69 = vsel %vm61, %v53, %v44
    %v70 = vsel %vm62, %v54, %v45
    %v71 = vsel %vm63, %v55, %v46
    %v72 = vsel %vm64, %v56, %v47
    %v73 = vsel %vm65, %v57, %v48
    %v74 = vsel %vm66, %v58, %v49
    %v75 = vsel %vm59, 1, 0
    %v76 = vsel %vm60, 1, 0
    %v77 = vsel %vm61, 1, 0
    %v78 = vsel %vm62, 1, 0
    %v79 = vsel %vm63, 1, 0
    %v80 = vsel %vm64, 1, 0
    %v81 = vsel %vm65, 1, 0
    %v82 = vsel %vm66, 1, 0
    %s83 = scalar_lea.vmem [#allocation2], 64
    %v84 = vld [vmem:[%s83] sm:$0xff]
    %v85 = vld [vmem:[%s83 + $0x8] sm:$0xff]
    %v86 = vld [vmem:[%s83 + $0x10] sm:$0xff]
    %v87 = vld [vmem:[%s83 + $0x18] sm:$0xff]
    %v88 = vld [vmem:[%s83 + $0x260] sm:$0xff]
    %v89 = vld [vmem:[%s83 + $0x268] sm:$0xff]
    %v90 = vld [vmem:[%s83 + $0x270] sm:$0xff]
    %v91 = vld [vmem:[%s83 + $0x278] sm:$0xff]
    %vm92 = vcmp.gt.f32.partialorder %v84, %v67
    %vm93 = vcmp.gt.f32.partialorder %v85, %v68
    %vm94 = vcmp.gt.f32.partialorder %v86, %v69
    %vm95 = vcmp.gt.f32.partialorder %v87, %v70
    %vm96 = vcmp.gt.f32.partialorder %v88, %v71
    %vm97 = vcmp.gt.f32.partialorder %v89, %v72
    %vm98 = vcmp.gt.f32.partialorder %v90, %v73
    %vm99 = vcmp.gt.f32.partialorder %v91, %v74
    %v100 = vsel %vm92, %v84, %v67
    %v101 = vsel %vm93, %v85, %v68
    %v102 = vsel %vm94, %v86, %v69
    %v103 = vsel %vm95, %v87, %v70
    %v104 = vsel %vm96, %v88, %v71
    %v105 = vsel %vm97, %v89, %v72
    %v106 = vsel %vm98, %v90, %v73
    %v107 = vsel %vm99, %v91, %v74
    %v108 = vsel %vm92, 2, %v75
    %v109 = vsel %vm93, 2, %v76
    %v110 = vsel %vm94, 2, %v77
    %v111 = vsel %vm95, 2, %v78
    %v112 = vsel %vm96, 2, %v79
    %v113 = vsel %vm97, 2, %v80
    %v114 = vsel %vm98, 2, %v81
    %v115 = vsel %vm99, 2, %v82
    %s116 = scalar_lea.vmem [#allocation2], 96
    %v117 = vld [vmem:[%s116] sm:$0xff]
    %v118 = vld [vmem:[%s116 + $0x8] sm:$0xff]
    %v119 = vld [vmem:[%s116 + $0x10] sm:$0xff]
    %v120 = vld [vmem:[%s116 + $0x18] sm:$0xff]
    %v121 = vld [vmem:[%s116 + $0x260] sm:$0xff]
    %v122 = vld [vmem:[%s116 + $0x268] sm:$0xff]
    %v123 = vld [vmem:[%s116 + $0x270] sm:$0xff]
    %v124 = vld [vmem:[%s116 + $0x278] sm:$0xff]
    %vm125 = vcmp.gt.f32.partialorder %v117, %v100
    %vm126 = vcmp.gt.f32.partialorder %v118, %v101
    %vm127 = vcmp.gt.f32.partialorder %v119, %v102
    %vm128 = vcmp.gt.f32.partialorder %v120, %v103
    %vm129 = vcmp.gt.f32.partialorder %v121, %v104
    %vm130 = vcmp.gt.f32.partialorder %v122, %v105
    %vm131 = vcmp.gt.f32.partialorder %v123, %v106
    %vm132 = vcmp.gt.f32.partialorder %v124, %v107
    %v133 = vsel %vm125, %v117, %v100
    %v134 = vsel %vm126, %v118, %v101
    %v135 = vsel %vm127, %v119, %v102
    %v136 = vsel %vm128, %v120, %v103
    %v137 = vsel %vm129, %v121, %v104
    %v138 = vsel %vm130, %v122, %v105
    %v139 = vsel %vm131, %v123, %v106
    %v140 = vsel %vm132, %v124, %v107
    %v141 = vsel %vm125, 3, %v108
    %v142 = vsel %vm126, 3, %v109
    %v143 = vsel %vm127, 3, %v110
    %v144 = vsel %vm128, 3, %v111
    %v145 = vsel %vm129, 3, %v112
    %v146 = vsel %vm130, 3, %v113
    %v147 = vsel %vm131, 3, %v114
    %v148 = vsel %vm132, 3, %v115
    %s149 = scalar_lea.vmem [#allocation2], 128
    %v150 = vld [vmem:[%s149] sm:$0xff]
    %v151 = vld [vmem:[%s149 + $0x8] sm:$0xff]
    %v152 = vld [vmem:[%s149 + $0x10] sm:$0xff]
    %v153 = vld [vmem:[%s149 + $0x18] sm:$0xff]
    %v154 = vld [vmem:[%s149 + $0x260] sm:$0xff]
    %v155 = vld [vmem:[%s149 + $0x268] sm:$0xff]
    %v156 = vld [vmem:[%s149 + $0x270] sm:$0xff]
    %v157 = vld [vmem:[%s149 + $0x278] sm:$0xff]
    %vm158 = vcmp.gt.f32.partialorder %v150, %v133
    %vm159 = vcmp.gt.f32.partialorder %v151, %v134
    %vm160 = vcmp.gt.f32.partialorder %v152, %v135
    %vm161 = vcmp.gt.f32.partialorder %v153, %v136
    %vm162 = vcmp.gt.f32.partialorder %v154, %v137
    %vm163 = vcmp.gt.f32.partialorder %v155, %v138
    %vm164 = vcmp.gt.f32.partialorder %v156, %v139
    %vm165 = vcmp.gt.f32.partialorder %v157, %v140
    %v166 = vsel %vm158, %v150, %v133
    %v167 = vsel %vm159, %v151, %v134
    %v168 = vsel %vm160, %v152, %v135
    %v169 = vsel %vm161, %v153, %v136
    %v170 = vsel %vm162, %v154, %v137
    %v171 = vsel %vm163, %v155, %v138
    %v172 = vsel %vm164, %v156, %v139
    %v173 = vsel %vm165, %v157, %v140
    %v174 = vsel %vm158, 4, %v141
    %v175 = vsel %vm159, 4, %v142
    %v176 = vsel %vm160, 4, %v143
    %v177 = vsel %vm161, 4, %v144
    %v178 = vsel %vm162, 4, %v145
    %v179 = vsel %vm163, 4, %v146
    %v180 = vsel %vm164, 4, %v147
    %v181 = vsel %vm165, 4, %v148
    %s182 = scalar_lea.vmem [#allocation2], 160
    %v183 = vld [vmem:[%s182] sm:$0xff]
    %v184 = vld [vmem:[%s182 + $0x8] sm:$0xff]
    %v185 = vld [vmem:[%s182 + $0x10] sm:$0xff]
    %v186 = vld [vmem:[%s182 + $0x18] sm:$0xff]
    %v187 = vld [vmem:[%s182 + $0x260] sm:$0xff]
    %v188 = vld [vmem:[%s182 + $0x268] sm:$0xff]
    %v189 = vld [vmem:[%s182 + $0x270] sm:$0xff]
    %v190 = vld [vmem:[%s182 + $0x278] sm:$0xff]
    %vm191 = vcmp.gt.f32.partialorder %v183, %v166
    %vm192 = vcmp.gt.f32.partialorder %v184, %v167
    %vm193 = vcmp.gt.f32.partialorder %v185, %v168
    %vm194 = vcmp.gt.f32.partialorder %v186, %v169
    %vm195 = vcmp.gt.f32.partialorder %v187, %v170
    %vm196 = vcmp.gt.f32.partialorder %v188, %v171
    %vm197 = vcmp.gt.f32.partialorder %v189, %v172
    %vm198 = vcmp.gt.f32.partialorder %v190, %v173
    %v199 = vsel %vm191, %v183, %v166
    %v200 = vsel %vm192, %v184, %v167
    %v201 = vsel %vm193, %v185, %v168
    %v202 = vsel %vm194, %v186, %v169
    %v203 = vsel %vm195, %v187, %v170
    %v204 = vsel %vm196, %v188, %v171
    %v205 = vsel %vm197, %v189, %v172
    %v206 = vsel %vm198, %v190, %v173
    %v207 = vsel %vm191, 5, %v174
    %v208 = vsel %vm192, 5, %v175
    %v209 = vsel %vm193, 5, %v176
    %v210 = vsel %vm194, 5, %v177
    %v211 = vsel %vm195, 5, %v178
    %v212 = vsel %vm196, 5, %v179
    %v213 = vsel %vm197, 5, %v180
    %v214 = vsel %vm198, 5, %v181
    %s215 = scalar_lea.vmem [#allocation2], 192
    %v216 = vld [vmem:[%s215] sm:$0xff]
    %v217 = vld [vmem:[%s215 + $0x8] sm:$0xff]
    %v218 = vld [vmem:[%s215 + $0x10] sm:$0xff]
    %v219 = vld [vmem:[%s215 + $0x18] sm:$0xff]
    %v220 = vld [vmem:[%s215 + $0x260] sm:$0xff]
    %v221 = vld [vmem:[%s215 + $0x268] sm:$0xff]
    %v222 = vld [vmem:[%s215 + $0x270] sm:$0xff]
    %v223 = vld [vmem:[%s215 + $0x278] sm:$0xff]
    %vm224 = vcmp.gt.f32.partialorder %v216, %v199
    %vm225 = vcmp.gt.f32.partialorder %v217, %v200
    %vm226 = vcmp.gt.f32.partialorder %v218, %v201
    %vm227 = vcmp.gt.f32.partialorder %v219, %v202
    %vm228 = vcmp.gt.f32.partialorder %v220, %v203
    %vm229 = vcmp.gt.f32.partialorder %v221, %v204
    %vm230 = vcmp.gt.f32.partialorder %v222, %v205
    %vm231 = vcmp.gt.f32.partialorder %v223, %v206
    %v232 = vsel %vm224, %v216, %v199
    %v233 = vsel %vm225, %v217, %v200
    %v234 = vsel %vm226, %v218, %v201
    %v235 = vsel %vm227, %v219, %v202
    %v236 = vsel %vm228, %v220, %v203
    %v237 = vsel %vm229, %v221, %v204
    %v238 = vsel %vm230, %v222, %v205
    %v239 = vsel %vm231, %v223, %v206
    %v240 = vsel %vm224, 6, %v207
    %v241 = vsel %vm225, 6, %v208
    %v242 = vsel %vm226, 6, %v209
    %v243 = vsel %vm227, 6, %v210
    %v244 = vsel %vm228, 6, %v211
    %v245 = vsel %vm229, 6, %v212
    %v246 = vsel %vm230, 6, %v213
    %v247 = vsel %vm231, 6, %v214
    %s248 = scalar_lea.vmem [#allocation2], 224
    %v249 = vld [vmem:[%s248] sm:$0xff]
    %v250 = vld [vmem:[%s248 + $0x8] sm:$0xff]
    %v251 = vld [vmem:[%s248 + $0x10] sm:$0xff]
    %v252 = vld [vmem:[%s248 + $0x18] sm:$0xff]
    %v253 = vld [vmem:[%s248 + $0x260] sm:$0xff]
    %v254 = vld [vmem:[%s248 + $0x268] sm:$0xff]
    %v255 = vld [vmem:[%s248 + $0x270] sm:$0xff]
    %v256 = vld [vmem:[%s248 + $0x278] sm:$0xff]
    %vm257 = vcmp.gt.f32.partialorder %v249, %v232
    %vm258 = vcmp.gt.f32.partialorder %v250, %v233
    %vm259 = vcmp.gt.f32.partialorder %v251, %v234
    %vm260 = vcmp.gt.f32.partialorder %v252, %v235
    %vm261 = vcmp.gt.f32.partialorder %v253, %v236
    %vm262 = vcmp.gt.f32.partialorder %v254, %v237
    %vm263 = vcmp.gt.f32.partialorder %v255, %v238
    %vm264 = vcmp.gt.f32.partialorder %v256, %v239
    %v265 = vsel %vm257, %v249, %v232
    %v266 = vsel %vm258, %v250, %v233
    %v267 = vsel %vm259, %v251, %v234
    %v268 = vsel %vm260, %v252, %v235
    %v269 = vsel %vm261, %v253, %v236
    %v270 = vsel %vm262, %v254, %v237
    %v271 = vsel %vm263, %v255, %v238
    %v272 = vsel %vm264, %v256, %v239
    %v273 = vsel %vm257, 7, %v240
    %v274 = vsel %vm258, 7, %v241
    %v275 = vsel %vm259, 7, %v242
    %v276 = vsel %vm260, 7, %v243
    %v277 = vsel %vm261, 7, %v244
    %v278 = vsel %vm262, 7, %v245
    %v279 = vsel %vm263, 7, %v246
    %v280 = vsel %vm264, 7, %v247
    %s281 = scalar_lea.vmem [#allocation2], 256
    %v282 = vld [vmem:[%s281] sm:$0xff]
    %v283 = vld [vmem:[%s281 + $0x8] sm:$0xff]
    %v284 = vld [vmem:[%s281 + $0x10] sm:$0xff]
    %v285 = vld [vmem:[%s281 + $0x18] sm:$0xff]
    %v286 = vld [vmem:[%s281 + $0x260] sm:$0xff]
    %v287 = vld [vmem:[%s281 + $0x268] sm:$0xff]
    %v288 = vld [vmem:[%s281 + $0x270] sm:$0xff]
    %v289 = vld [vmem:[%s281 + $0x278] sm:$0xff]
    %vm290 = vcmp.gt.f32.partialorder %v282, %v265
    %vm291 = vcmp.gt.f32.partialorder %v283, %v266
    %vm292 = vcmp.gt.f32.partialorder %v284, %v267
    %vm293 = vcmp.gt.f32.partialorder %v285, %v268
    %vm294 = vcmp.gt.f32.partialorder %v286, %v269
    %vm295 = vcmp.gt.f32.partialorder %v287, %v270
    %vm296 = vcmp.gt.f32.partialorder %v288, %v271
    %vm297 = vcmp.gt.f32.partialorder %v289, %v272
    %v298 = vsel %vm290, %v282, %v265
    %v299 = vsel %vm291, %v283, %v266
    %v300 = vsel %vm292, %v284, %v267
    %v301 = vsel %vm293, %v285, %v268
    %v302 = vsel %vm294, %v286, %v269
    %v303 = vsel %vm295, %v287, %v270
    %v304 = vsel %vm296, %v288, %v271
    %v305 = vsel %vm297, %v289, %v272
    %v306 = vsel %vm290, 8, %v273
    %v307 = vsel %vm291, 8, %v274
    %v308 = vsel %vm292, 8, %v275
    %v309 = vsel %vm293, 8, %v276
    %v310 = vsel %vm294, 8, %v277
    %v311 = vsel %vm295, 8, %v278
    %v312 = vsel %vm296, 8, %v279
    %v313 = vsel %vm297, 8, %v280
    %s314 = scalar_lea.vmem [#allocation2], 288
    %v315 = vld [vmem:[%s314] sm:$0xff]
    %v316 = vld [vmem:[%s314 + $0x8] sm:$0xff]
    %v317 = vld [vmem:[%s314 + $0x10] sm:$0xff]
    %v318 = vld [vmem:[%s314 + $0x18] sm:$0xff]
    %v319 = vld [vmem:[%s314 + $0x260] sm:$0xff]
    %v320 = vld [vmem:[%s314 + $0x268] sm:$0xff]
    %v321 = vld [vmem:[%s314 + $0x270] sm:$0xff]
    %v322 = vld [vmem:[%s314 + $0x278] sm:$0xff]
    %vm323 = vcmp.gt.f32.partialorder %v315, %v298
    %vm324 = vcmp.gt.f32.partialorder %v316, %v299
    %vm325 = vcmp.gt.f32.partialorder %v317, %v300
    %vm326 = vcmp.gt.f32.partialorder %v318, %v301
    %vm327 = vcmp.gt.f32.partialorder %v319, %v302
    %vm328 = vcmp.gt.f32.partialorder %v320, %v303
    %vm329 = vcmp.gt.f32.partialorder %v321, %v304
    %vm330 = vcmp.gt.f32.partialorder %v322, %v305
    %v331 = vsel %vm323, %v315, %v298
    %v332 = vsel %vm324, %v316, %v299
    %v333 = vsel %vm325, %v317, %v300
    %v334 = vsel %vm326, %v318, %v301
    %v335 = vsel %vm327, %v319, %v302
    %v336 = vsel %vm328, %v320, %v303
    %v337 = vsel %vm329, %v321, %v304
    %v338 = vsel %vm330, %v322, %v305
    %v339 = vsel %vm323, 9, %v306
    %v340 = vsel %vm324, 9, %v307
    %v341 = vsel %vm325, 9, %v308
    %v342 = vsel %vm326, 9, %v309
    %v343 = vsel %vm327, 9, %v310
    %v344 = vsel %vm328, 9, %v311
    %v345 = vsel %vm329, 9, %v312
    %v346 = vsel %vm330, 9, %v313
    %s347 = scalar_lea.vmem [#allocation2], 320
    %v348 = vld [vmem:[%s347] sm:$0xff]
    %v349 = vld [vmem:[%s347 + $0x8] sm:$0xff]
    %v350 = vld [vmem:[%s347 + $0x10] sm:$0xff]
    %v351 = vld [vmem:[%s347 + $0x18] sm:$0xff]
    %v352 = vld [vmem:[%s347 + $0x260] sm:$0xff]
    %v353 = vld [vmem:[%s347 + $0x268] sm:$0xff]
    %v354 = vld [vmem:[%s347 + $0x270] sm:$0xff]
    %v355 = vld [vmem:[%s347 + $0x278] sm:$0xff]
    %vm356 = vcmp.gt.f32.partialorder %v348, %v331
    %vm357 = vcmp.gt.f32.partialorder %v349, %v332
    %vm358 = vcmp.gt.f32.partialorder %v350, %v333
    %vm359 = vcmp.gt.f32.partialorder %v351, %v334
    %vm360 = vcmp.gt.f32.partialorder %v352, %v335
    %vm361 = vcmp.gt.f32.partialorder %v353, %v336
    %vm362 = vcmp.gt.f32.partialorder %v354, %v337
    %vm363 = vcmp.gt.f32.partialorder %v355, %v338
    %v364 = vsel %vm356, %v348, %v331
    %v365 = vsel %vm357, %v349, %v332
    %v366 = vsel %vm358, %v350, %v333
    %v367 = vsel %vm359, %v351, %v334
    %v368 = vsel %vm360, %v352, %v335
    %v369 = vsel %vm361, %v353, %v336
    %v370 = vsel %vm362, %v354, %v337
    %v371 = vsel %vm363, %v355, %v338
    %v372 = vsel %vm356, 10, %v339
    %v373 = vsel %vm357, 10, %v340
    %v374 = vsel %vm358, 10, %v341
    %v375 = vsel %vm359, 10, %v342
    %v376 = vsel %vm360, 10, %v343
    %v377 = vsel %vm361, 10, %v344
    %v378 = vsel %vm362, 10, %v345
    %v379 = vsel %vm363, 10, %v346
    %s380 = scalar_lea.vmem [#allocation2], 352
    %v381 = vld [vmem:[%s380] sm:$0xff]
    %v382 = vld [vmem:[%s380 + $0x8] sm:$0xff]
    %v383 = vld [vmem:[%s380 + $0x10] sm:$0xff]
    %v384 = vld [vmem:[%s380 + $0x18] sm:$0xff]
    %v385 = vld [vmem:[%s380 + $0x260] sm:$0xff]
    %v386 = vld [vmem:[%s380 + $0x268] sm:$0xff]
    %v387 = vld [vmem:[%s380 + $0x270] sm:$0xff]
    %v388 = vld [vmem:[%s380 + $0x278] sm:$0xff]
    %vm389 = vcmp.gt.f32.partialorder %v381, %v364
    %vm390 = vcmp.gt.f32.partialorder %v382, %v365
    %vm391 = vcmp.gt.f32.partialorder %v383, %v366
    %vm392 = vcmp.gt.f32.partialorder %v384, %v367
    %vm393 = vcmp.gt.f32.partialorder %v385, %v368
    %vm394 = vcmp.gt.f32.partialorder %v386, %v369
    %vm395 = vcmp.gt.f32.partialorder %v387, %v370
    %vm396 = vcmp.gt.f32.partialorder %v388, %v371
    %v397 = vsel %vm389, %v381, %v364
    %v398 = vsel %vm390, %v382, %v365
    %v399 = vsel %vm391, %v383, %v366
    %v400 = vsel %vm392, %v384, %v367
    %v401 = vsel %vm393, %v385, %v368
    %v402 = vsel %vm394, %v386, %v369
    %v403 = vsel %vm395, %v387, %v370
    %v404 = vsel %vm396, %v388, %v371
    %v405 = vsel %vm389, 11, %v372
    %v406 = vsel %vm390, 11, %v373
    %v407 = vsel %vm391, 11, %v374
    %v408 = vsel %vm392, 11, %v375
    %v409 = vsel %vm393, 11, %v376
    %v410 = vsel %vm394, 11, %v377
    %v411 = vsel %vm395, 11, %v378
    %v412 = vsel %vm396, 11, %v379
    %s413 = scalar_lea.vmem [#allocation2], 384
    %v414 = vld [vmem:[%s413] sm:$0xff]
    %v415 = vld [vmem:[%s413 + $0x8] sm:$0xff]
    %v416 = vld [vmem:[%s413 + $0x10] sm:$0xff]
    %v417 = vld [vmem:[%s413 + $0x18] sm:$0xff]
    %v418 = vld [vmem:[%s413 + $0x260] sm:$0xff]
    %v419 = vld [vmem:[%s413 + $0x268] sm:$0xff]
    %v420 = vld [vmem:[%s413 + $0x270] sm:$0xff]
    %v421 = vld [vmem:[%s413 + $0x278] sm:$0xff]
    %vm422 = vcmp.gt.f32.partialorder %v414, %v397
    %vm423 = vcmp.gt.f32.partialorder %v415, %v398
    %vm424 = vcmp.gt.f32.partialorder %v416, %v399
    %vm425 = vcmp.gt.f32.partialorder %v417, %v400
    %vm426 = vcmp.gt.f32.partialorder %v418, %v401
    %vm427 = vcmp.gt.f32.partialorder %v419, %v402
    %vm428 = vcmp.gt.f32.partialorder %v420, %v403
    %vm429 = vcmp.gt.f32.partialorder %v421, %v404
    %v430 = vsel %vm422, %v414, %v397
    %v431 = vsel %vm423, %v415, %v398
    %v432 = vsel %vm424, %v416, %v399
    %v433 = vsel %vm425, %v417, %v400
    %v434 = vsel %vm426, %v418, %v401
    %v435 = vsel %vm427, %v419, %v402
    %v436 = vsel %vm428, %v420, %v403
    %v437 = vsel %vm429, %v421, %v404
    %v438 = vsel %vm422, 12, %v405
    %v439 = vsel %vm423, 12, %v406
    %v440 = vsel %vm424, 12, %v407
    %v441 = vsel %vm425, 12, %v408
    %v442 = vsel %vm426, 12, %v409
    %v443 = vsel %vm427, 12, %v410
    %v444 = vsel %vm428, 12, %v411
    %v445 = vsel %vm429, 12, %v412
    %s446 = scalar_lea.vmem [#allocation2], 416
    %v447 = vld [vmem:[%s446] sm:$0xff]
    %v448 = vld [vmem:[%s446 + $0x8] sm:$0xff]
    %v449 = vld [vmem:[%s446 + $0x10] sm:$0xff]
    %v450 = vld [vmem:[%s446 + $0x18] sm:$0xff]
    %v451 = vld [vmem:[%s446 + $0x260] sm:$0xff]
    %v452 = vld [vmem:[%s446 + $0x268] sm:$0xff]
    %v453 = vld [vmem:[%s446 + $0x270] sm:$0xff]
    %v454 = vld [vmem:[%s446 + $0x278] sm:$0xff]
    %vm455 = vcmp.gt.f32.partialorder %v447, %v430
    %vm456 = vcmp.gt.f32.partialorder %v448, %v431
    %vm457 = vcmp.gt.f32.partialorder %v449, %v432
    %vm458 = vcmp.gt.f32.partialorder %v450, %v433
    %vm459 = vcmp.gt.f32.partialorder %v451, %v434
    %vm460 = vcmp.gt.f32.partialorder %v452, %v435
    %vm461 = vcmp.gt.f32.partialorder %v453, %v436
    %vm462 = vcmp.gt.f32.partialorder %v454, %v437
    %v463 = vsel %vm455, %v447, %v430
    %v464 = vsel %vm456, %v448, %v431
    %v465 = vsel %vm457, %v449, %v432
    %v466 = vsel %vm458, %v450, %v433
    %v467 = vsel %vm459, %v451, %v434
    %v468 = vsel %vm460, %v452, %v435
    %v469 = vsel %vm461, %v453, %v436
    %v470 = vsel %vm462, %v454, %v437
    %v471 = vsel %vm455, 13, %v438
    %v472 = vsel %vm456, 13, %v439
    %v473 = vsel %vm457, 13, %v440
    %v474 = vsel %vm458, 13, %v441
    %v475 = vsel %vm459, 13, %v442
    %v476 = vsel %vm460, 13, %v443
    %v477 = vsel %vm461, 13, %v444
    %v478 = vsel %vm462, 13, %v445
    %s479 = scalar_lea.vmem [#allocation2], 448
    %v480 = vld [vmem:[%s479] sm:$0xff]
    %v481 = vld [vmem:[%s479 + $0x8] sm:$0xff]
    %v482 = vld [vmem:[%s479 + $0x10] sm:$0xff]
    %v483 = vld [vmem:[%s479 + $0x18] sm:$0xff]
    %v484 = vld [vmem:[%s479 + $0x260] sm:$0xff]
    %v485 = vld [vmem:[%s479 + $0x268] sm:$0xff]
    %v486 = vld [vmem:[%s479 + $0x270] sm:$0xff]
    %v487 = vld [vmem:[%s479 + $0x278] sm:$0xff]
    %vm488 = vcmp.gt.f32.partialorder %v480, %v463
    %vm489 = vcmp.gt.f32.partialorder %v481, %v464
    %vm490 = vcmp.gt.f32.partialorder %v482, %v465
    %vm491 = vcmp.gt.f32.partialorder %v483, %v466
    %vm492 = vcmp.gt.f32.partialorder %v484, %v467
    %vm493 = vcmp.gt.f32.partialorder %v485, %v468
    %vm494 = vcmp.gt.f32.partialorder %v486, %v469
    %vm495 = vcmp.gt.f32.partialorder %v487, %v470
    %v496 = vsel %vm488, %v480, %v463
    %v497 = vsel %vm489, %v481, %v464
    %v498 = vsel %vm490, %v482, %v465
    %v499 = vsel %vm491, %v483, %v466
    %v500 = vsel %vm492, %v484, %v467
    %v501 = vsel %vm493, %v485, %v468
    %v502 = vsel %vm494, %v486, %v469
    %v503 = vsel %vm495, %v487, %v470
    %v504 = vsel %vm488, 14, %v471
    %v505 = vsel %vm489, 14, %v472
    %v506 = vsel %vm490, 14, %v473
    %v507 = vsel %vm491, 14, %v474
    %v508 = vsel %vm492, 14, %v475
    %v509 = vsel %vm493, 14, %v476
    %v510 = vsel %vm494, 14, %v477
    %v511 = vsel %vm495, 14, %v478
    %s512 = scalar_lea.vmem [#allocation2], 480
    %v513 = vld [vmem:[%s512] sm:$0xff]
    %v514 = vld [vmem:[%s512 + $0x8] sm:$0xff]
    %v515 = vld [vmem:[%s512 + $0x10] sm:$0xff]
    %v516 = vld [vmem:[%s512 + $0x18] sm:$0xff]
    %v517 = vld [vmem:[%s512 + $0x260] sm:$0xff]
    %v518 = vld [vmem:[%s512 + $0x268] sm:$0xff]
    %v519 = vld [vmem:[%s512 + $0x270] sm:$0xff]
    %v520 = vld [vmem:[%s512 + $0x278] sm:$0xff]
    %vm521 = vcmp.gt.f32.partialorder %v513, %v496
    %vm522 = vcmp.gt.f32.partialorder %v514, %v497
    %vm523 = vcmp.gt.f32.partialorder %v515, %v498
    %vm524 = vcmp.gt.f32.partialorder %v516, %v499
    %vm525 = vcmp.gt.f32.partialorder %v517, %v500
    %vm526 = vcmp.gt.f32.partialorder %v518, %v501
    %vm527 = vcmp.gt.f32.partialorder %v519, %v502
    %vm528 = vcmp.gt.f32.partialorder %v520, %v503
    %v529 = vsel %vm521, %v513, %v496
    %v530 = vsel %vm522, %v514, %v497
    %v531 = vsel %vm523, %v515, %v498
    %v532 = vsel %vm524, %v516, %v499
    %v533 = vsel %vm525, %v517, %v500
    %v534 = vsel %vm526, %v518, %v501
    %v535 = vsel %vm527, %v519, %v502
    %v536 = vsel %vm528, %v520, %v503
    %v537 = vsel %vm521, 15, %v504
    %v538 = vsel %vm522, 15, %v505
    %v539 = vsel %vm523, 15, %v506
    %v540 = vsel %vm524, 15, %v507
    %v541 = vsel %vm525, 15, %v508
    %v542 = vsel %vm526, 15, %v509
    %v543 = vsel %vm527, 15, %v510
    %v544 = vsel %vm528, 15, %v511
    %s545 = scalar_lea.vmem [#allocation2], 512
    %v546 = vld [vmem:[%s545] sm:$0xff]
    %v547 = vld [vmem:[%s545 + $0x8] sm:$0xff]
    %v548 = vld [vmem:[%s545 + $0x10] sm:$0xff]
    %v549 = vld [vmem:[%s545 + $0x18] sm:$0xff]
    %v550 = vld [vmem:[%s545 + $0x260] sm:$0xff]
    %v551 = vld [vmem:[%s545 + $0x268] sm:$0xff]
    %v552 = vld [vmem:[%s545 + $0x270] sm:$0xff]
    %v553 = vld [vmem:[%s545 + $0x278] sm:$0xff]
    %vm554 = vcmp.gt.f32.partialorder %v546, %v529
    %vm555 = vcmp.gt.f32.partialorder %v547, %v530
    %vm556 = vcmp.gt.f32.partialorder %v548, %v531
    %vm557 = vcmp.gt.f32.partialorder %v549, %v532
    %vm558 = vcmp.gt.f32.partialorder %v550, %v533
    %vm559 = vcmp.gt.f32.partialorder %v551, %v534
    %vm560 = vcmp.gt.f32.partialorder %v552, %v535
    %vm561 = vcmp.gt.f32.partialorder %v553, %v536
    %v562 = vsel %vm554, %v546, %v529
    %v563 = vsel %vm555, %v547, %v530
    %v564 = vsel %vm556, %v548, %v531
    %v565 = vsel %vm557, %v549, %v532
    %v566 = vsel %vm558, %v550, %v533
    %v567 = vsel %vm559, %v551, %v534
    %v568 = vsel %vm560, %v552, %v535
    %v569 = vsel %vm561, %v553, %v536
    %v570 = vsel %vm554, 16, %v537
    %v571 = vsel %vm555, 16, %v538
    %v572 = vsel %vm556, 16, %v539
    %v573 = vsel %vm557, 16, %v540
    %v574 = vsel %vm558, 16, %v541
    %v575 = vsel %vm559, 16, %v542
    %v576 = vsel %vm560, 16, %v543
    %v577 = vsel %vm561, 16, %v544
    %s578 = scalar_lea.vmem [#allocation2], 544
    %v579 = vld [vmem:[%s578] sm:$0xff]
    %v580 = vld [vmem:[%s578 + $0x8] sm:$0xff]
    %v581 = vld [vmem:[%s578 + $0x10] sm:$0xff]
    %v582 = vld [vmem:[%s578 + $0x18] sm:$0xff]
    %v583 = vld [vmem:[%s578 + $0x260] sm:$0xff]
    %v584 = vld [vmem:[%s578 + $0x268] sm:$0xff]
    %v585 = vld [vmem:[%s578 + $0x270] sm:$0xff]
    %v586 = vld [vmem:[%s578 + $0x278] sm:$0xff]
    %vm587 = vcmp.gt.f32.partialorder %v579, %v562
    %vm588 = vcmp.gt.f32.partialorder %v580, %v563
    %vm589 = vcmp.gt.f32.partialorder %v581, %v564
    %vm590 = vcmp.gt.f32.partialorder %v582, %v565
    %vm591 = vcmp.gt.f32.partialorder %v583, %v566
    %vm592 = vcmp.gt.f32.partialorder %v584, %v567
    %vm593 = vcmp.gt.f32.partialorder %v585, %v568
    %vm594 = vcmp.gt.f32.partialorder %v586, %v569
    %v595 = vsel %vm587, %v579, %v562
    %v596 = vsel %vm588, %v580, %v563
    %v597 = vsel %vm589, %v581, %v564
    %v598 = vsel %vm590, %v582, %v565
    %v599 = vsel %vm591, %v583, %v566
    %v600 = vsel %vm592, %v584, %v567
    %v601 = vsel %vm593, %v585, %v568
    %v602 = vsel %vm594, %v586, %v569
    %v603 = vsel %vm587, 17, %v570
    %v604 = vsel %vm588, 17, %v571
    %v605 = vsel %vm589, 17, %v572
    %v606 = vsel %vm590, 17, %v573
    %v607 = vsel %vm591, 17, %v574
    %v608 = vsel %vm592, 17, %v575
    %v609 = vsel %vm593, 17, %v576
    %v610 = vsel %vm594, 17, %v577
    %s611 = scalar_lea.vmem [#allocation2], 576
    %v612 = vld [vmem:[%s611] sm:$0xff]
    %v613 = vld [vmem:[%s611 + $0x8] sm:$0xff]
    %v614 = vld [vmem:[%s611 + $0x10] sm:$0xff]
    %v615 = vld [vmem:[%s611 + $0x18] sm:$0xff]
    %v616 = vld [vmem:[%s611 + $0x260] sm:$0xff]
    %v617 = vld [vmem:[%s611 + $0x268] sm:$0xff]
    %v618 = vld [vmem:[%s611 + $0x270] sm:$0xff]
    %v619 = vld [vmem:[%s611 + $0x278] sm:$0xff]
    %vm620 = vcmp.gt.f32.partialorder %v612, %v595
    %vm621 = vcmp.gt.f32.partialorder %v613, %v596
    %vm622 = vcmp.gt.f32.partialorder %v614, %v597
    %vm623 = vcmp.gt.f32.partialorder %v615, %v598
    %vm624 = vcmp.gt.f32.partialorder %v616, %v599
    %vm625 = vcmp.gt.f32.partialorder %v617, %v600
    %vm626 = vcmp.gt.f32.partialorder %v618, %v601
    %vm627 = vcmp.gt.f32.partialorder %v619, %v602
    %v628 = vsel %vm620, %v612, %v595
    %v629 = vsel %vm621, %v613, %v596
    %v630 = vsel %vm622, %v614, %v597
    %v631 = vsel %vm623, %v615, %v598
    %v632 = vsel %vm624, %v616, %v599
    %v633 = vsel %vm625, %v617, %v600
    %v634 = vsel %vm626, %v618, %v601
    %v635 = vsel %vm627, %v619, %v602
    %v636 = vsel %vm620, 18, %v603
    %v637 = vsel %vm621, 18, %v604
    %v638 = vsel %vm622, 18, %v605
    %v639 = vsel %vm623, 18, %v606
    %v640 = vsel %vm624, 18, %v607
    %v641 = vsel %vm625, 18, %v608
    %v642 = vsel %vm626, 18, %v609
    %v643 = vsel %vm627, 18, %v610
    %644 = vst [vmem:[#allocation5] sm:$0xff] %v628
    %645 = vst [vmem:[#allocation5 + $0x8] sm:$0xff] %v629
    %646 = vst [vmem:[#allocation5 + $0x10] sm:$0xff] %v630
    %647 = vst [vmem:[#allocation5 + $0x18] sm:$0xff] %v631
    %648 = vst [vmem:[#allocation5 + $0x20] sm:$0xff] %v632
    %649 = vst [vmem:[#allocation5 + $0x28] sm:$0xff] %v633
    %650 = vst [vmem:[#allocation5 + $0x30] sm:$0xff] %v634
    %651 = vst [vmem:[#allocation5 + $0x38] sm:$0xff] %v635
    %652 = vst [vmem:[#allocation6] sm:$0xff] %v636
    %653 = vst [vmem:[#allocation6 + $0x8] sm:$0xff] %v637
    %654 = vst [vmem:[#allocation6 + $0x10] sm:$0xff] %v638
    %655 = vst [vmem:[#allocation6 + $0x18] sm:$0xff] %v639
    %656 = vst [vmem:[#allocation6 + $0x20] sm:$0xff] %v640
    %657 = vst [vmem:[#allocation6 + $0x28] sm:$0xff] %v641
    %658 = vst [vmem:[#allocation6 + $0x30] sm:$0xff] %v642
    %659 = vst [vmem:[#allocation6 + $0x38] sm:$0xff] %v643
    // Predicated region
    $region10: #{tpu_custom_call.1} parent=1 // pred_check
      _
    $region11: #{tpu_custom_call.1} parent=1 // pred_check_branch
      %661 = sbr.rel (0) target = $region13
    $region12: #{tpu_custom_call.1} parent=1 // pred_region
      %s663 = ssub.s32 1024, 1024
      %664 = vsyncadd [#allocation4], %s663
      %s665 = sshll.u32 [#allocation5], 4
      %s666 = int_to_ptr.vmem [resolvable:$true] %s665
      %671 = dma.vmem_to_hbm [thread:$0]  %s666, 1024, %s1, [#allocation4], 128, 128, 8
    $region13: #{tpu_custom_call.1} parent=1 // pred_fallthru
      _
    // Predicated region
    $region14: #{tpu_custom_call.1} parent=1 // pred_check
      _
    $region15: #{tpu_custom_call.1} parent=1 // pred_check_branch
      %673 = sbr.rel (0) target = $region17
    $region16: #{tpu_custom_call.1} parent=1 // pred_region
      %s675 = ssub.s32 1024, 1024
      %676 = vsyncadd [#allocation7], %s675
      %s677 = sshll.u32 [#allocation6], 4
      %s678 = int_to_ptr.vmem [resolvable:$true] %s677
      %683 = dma.vmem_to_hbm [thread:$0]  %s678, 1024, %s2, [#allocation7], 128, 128, 8
    $region17: #{tpu_custom_call.1} parent=1 // pred_fallthru
      _
    // Predicated region
    $region18: #{tpu_custom_call.1} parent=1 // pred_check
      _
    $region19: #{tpu_custom_call.1} parent=1 // pred_check_branch
      %685 = sbr.rel (0) target = $region21
    $region20: #{tpu_custom_call.1} parent=1 // pred_region
      %686 = dma.done [#allocation4], 1024
    $region21: #{tpu_custom_call.1} parent=1 // pred_fallthru
      _
    // Predicated region
    $region22: #{tpu_custom_call.1} parent=1 // pred_check
      _
    $region23: #{tpu_custom_call.1} parent=1 // pred_check_branch
      %688 = sbr.rel (0) target = $region25
    $region24: #{tpu_custom_call.1} parent=1 // pred_region
      %689 = dma.done [#allocation7], 1024
    $region25: #{tpu_custom_call.1} parent=1 // pred_fallthru
      _
    %690 = vsyncpa [#allocation3], 1
    %691 = vsyncpa [#allocation4], 1
    %692 = vsyncpa [#allocation7], 1

</llo_original>
